<compile_context>
chip_gen: v6e
topology: v6e:2x2x1
jax: 0.10.0
libtpu: 0.0.40
codegen_flags: <defaults>
</compile_context>

<pallas_src>
import functools

import jax
import jax.numpy as jnp
from jax.experimental import pallas as pl
from jax.experimental.pallas import tpu as pltpu


def _round_up(x, m):
    return ((x + m - 1) // m) * m


def _images_per_grid_step(batch):
    """v7x has 2 TensorCores/chip: keep one image per (parallel) grid step so
    the batch shards across cores.  Single-TC v5e/v6e: fold the whole batch
    into the lane axis and run a single grid step."""
    try:
        kind = jax.devices()[0].device_kind.lower()
    except Exception:
        kind = ""
    return 1 if "v7" in kind else batch


# ----------------------------------------------------------------------------
# Kernel 1: 3x3 SAME conv + bias + ReLU.
# One stacked K = 9*cin_p MXU contraction per grid step (bf16 in, f32 acc).
# ----------------------------------------------------------------------------
def conv3x3_relu_kernel(x_ref, w_ref, b_ref, o_ref, rhs_ref, *,
                        wp, n_out, cin_p, imgs):
    """Shapes (per grid step):
         x_ref:   (imgs, cin_p, l_in)     bf16 zero-padded, flattened images
         w_ref:   (cout_p, 9*cin_p)       bf16 tap-stacked weight slab (resident)
         b_ref:   (cout_p, 1)             f32
         o_ref:   (imgs, cout_p, n_out)   f32 channel-major output (padded grid)
         rhs_ref: (9*cin_p, imgs*n_out)   bf16 VMEM scratch (stacked taps)
    """
    # Stage each unaligned lane-shifted tap slice exactly once into an aligned
    # VMEM scratch; the contraction then becomes a single K=9*cin_p matmul
    # instead of nine lane-sparse K=cin_p ones.
    for kh in range(3):
        for kw in range(3):
            t = kh * 3 + kw
            off = kh * wp + kw                       # static lane offset
            for b in range(imgs):
                rhs_ref[t * cin_p:(t + 1) * cin_p,
                        b * n_out:(b + 1) * n_out] = x_ref[b, :, off:off + n_out]

    # One MXU contraction: (cout_p, 9*cin_p) @ (9*cin_p, imgs*n_out), f32 acc.
    acc = jnp.dot(w_ref[...], rhs_ref[...], preferred_element_type=jnp.float32)
    acc = jnp.maximum(acc + b_ref[...], 0.0)         # epilogue in f32 vregs

    for b in range(imgs):                            # lane-dense unmasked stores
        o_ref[b] = acc[:, b * n_out:(b + 1) * n_out].astype(o_ref.dtype)


def conv3x3_relu_pallas(x_nchw, w_oihw, b, *, images_per_step=None):
    B, Cin, H, W = x_nchw.shape
    Cout = w_oihw.shape[0]
    Hp, Wp = H + 2, W + 2

    cin_p = _round_up(Cin, 16)             # bf16 sublane pack (16 rows / vreg)
    cout_p = _round_up(Cout, 8)
    n_out = _round_up(H * Wp, 128)         # lane-dense output width per image
    max_off = 2 * Wp + 2                   # largest tap offset (kh=kw=2)

    # Fold the lane-tail padding into the halo pad: add zero rows at the bottom
    # so a SINGLE jnp.pad yields the full flat buffer (one HBM pass).
    need_tail = max(n_out + max_off - Hp * Wp, 0)
    extra_rows = (need_tail + Wp - 1) // Wp
    l_in = (Hp + extra_rows) * Wp          # == full last dim of the input array

    if images_per_step is None:
        images_per_step = _images_per_grid_step(B)
    if images_per_step <= 0 or B % images_per_step != 0:
        images_per_step = 1
    imgs = images_per_step
    grid = (B // imgs,)

    # bf16 activations halve HBM/VMEM traffic and feed the bf16-native MXU.
    x_pad = jnp.pad(x_nchw.astype(jnp.bfloat16),
                    ((0, 0), (0, cin_p - Cin), (1, 1 + extra_rows), (1, 1)))
    x_flat = x_pad.reshape(B, cin_p, l_in)

    # OIHW -> lane-dense (cout_p, 9*cin_p) slab; K ordered [tap0 ch0..cin_p-1,
    # tap1 ...] to match the scratch layout above.
    w_pad = jnp.pad(w_oihw, ((0, cout_p - Cout), (0, cin_p - Cin), (0, 0), (0, 0)))
    w_slab = jnp.transpose(w_pad, (0, 2, 3, 1)).reshape(cout_p, 9 * cin_p)
    w_slab = w_slab.astype(jnp.bfloat16)
    b_col = jnp.pad(b, (0, cout_p - Cout)).reshape(cout_p, 1).astype(jnp.float32)

    kernel = functools.partial(conv3x3_relu_kernel, wp=Wp, n_out=n_out,
                               cin_p=cin_p, imgs=imgs)
    out = pl.pallas_call(
        kernel,
        out_shape=jax.ShapeDtypeStruct((B, cout_p, n_out), jnp.float32),
        grid_spec=pltpu.PrefetchScalarGridSpec(
            num_scalar_prefetch=0,
            grid=grid,                               # v7x: one image per core
            in_specs=[
                pl.BlockSpec((imgs, cin_p, l_in), lambda g: (g, 0, 0)),
                pl.BlockSpec((cout_p, 9 * cin_p), lambda g: (0, 0)),  # resident
                pl.BlockSpec((cout_p, 1), lambda g: (0, 0)),
            ],
            out_specs=pl.BlockSpec((imgs, cout_p, n_out), lambda g: (g, 0, 0)),
            scratch_shapes=[pltpu.VMEM((9 * cin_p, imgs * n_out), jnp.bfloat16)],
        ),
        compiler_params=pltpu.CompilerParams(
            dimension_semantics=("parallel",)),
    )(x_flat, w_slab, b_col)

    # De-halo: valid output for pixel (h, w) lives at flat column h*Wp + w.
    # TODO(synk): at real ResNet sizes keep the padded channel-major flat
    # layout as the inter-layer format instead of paying this extra HBM pass;
    # it is only materialized here because res_gen must return dense NCHW.
    feat = out[:, :Cout, :H * Wp].reshape(B, Cout, H, Wp)[:, :, :, :W]
    return feat


# ----------------------------------------------------------------------------
# Kernel 2: classifier head = global average pool + linear.  Its output is the
# second element of model1's tuple, which res_gen discards (DCE'd under jit).
# TODO(synk): if the logits path were ever live, fuse this into the conv
# epilogue (masked lane-sum of valid columns + tiny dot) to avoid the extra
# feature-map HBM round trip.
# ----------------------------------------------------------------------------
def head_kernel(f_ref, w_ref, b_ref, o_ref):
    f = f_ref[...]                                        # (B, C, H*W) f32
    pooled = jnp.sum(f, axis=-1) * (1.0 / f.shape[-1])    # (B, C)
    logits = jnp.dot(pooled, w_ref[...], preferred_element_type=jnp.float32)
    o_ref[...] = (logits + b_ref[...]).astype(o_ref.dtype)


def head_pallas(feat_bcs, w_fc, b_fc):
    B, C, S = feat_bcs.shape
    ncls = w_fc.shape[1]
    return pl.pallas_call(
        head_kernel,
        out_shape=jax.ShapeDtypeStruct((B, ncls), jnp.float32),
        grid_spec=pltpu.PrefetchScalarGridSpec(
            num_scalar_prefetch=0,
            grid=(1,),
            in_specs=[
                pl.BlockSpec((B, C, S), lambda i: (0, 0, 0)),
                pl.BlockSpec((C, ncls), lambda i: (0, 0)),
                pl.BlockSpec((1, ncls), lambda i: (0, 0)),
            ],
            out_specs=pl.BlockSpec((B, ncls), lambda i: (0, 0)),
        ),
    )(feat_bcs, w_fc, b_fc.reshape(1, ncls))


# ----------------------------------------------------------------------------
# model1 (synthetic inner net) and res_gen.forward
# ----------------------------------------------------------------------------
def model1_forward(x_nchw, w_conv, b_conv, w_fc, b_fc):
    """Synthetic stand-in for the injected model1: returns (feature_map, logits)."""
    feat = conv3x3_relu_pallas(x_nchw, w_conv, b_conv)        # (B, Cout, H, W)
    B, Cout, H, W = feat.shape
    logits = head_pallas(feat.reshape(B, Cout, H * W), w_fc, b_fc)
    return feat, logits


@jax.jit
def res_gen_forward(x_nchw, w_conv, b_conv, w_fc, b_fc):
    """res_gen.forward:  `_, y = self.m1(input); return _`.

    The unused logits branch is dead code under jit (XLA DCEs it), which is
    functionally identical to PyTorch computing `y` and discarding it.
    """
    feat, _logits = model1_forward(x_nchw, w_conv, b_conv, w_fc, b_fc)
    return feat


if __name__ == "__main__":
    # Small shapes consistent with an image model: batch=2, channels=4, 16x16.
    B, Cin, H, W = 2, 4, 16, 16
    Cout, NCLS = 32, 8

    key = jax.random.PRNGKey(0)
    kx, kw1, kb1, kw2, kb2 = jax.random.split(key, 5)
    x = jax.random.normal(kx, (B, Cin, H, W), dtype=jnp.float32)
    w_conv = jax.random.normal(kw1, (Cout, Cin, 3, 3), dtype=jnp.float32) * 0.1
    b_conv = jax.random.normal(kb1, (Cout,), dtype=jnp.float32) * 0.1
    w_fc = jax.random.normal(kw2, (Cout, NCLS), dtype=jnp.float32) * 0.1
    b_fc = jax.random.normal(kb2, (NCLS,), dtype=jnp.float32) * 0.1

    out = res_gen_forward(x, w_conv, b_conv, w_fc, b_fc)
    out = jax.block_until_ready(out)
    assert out.shape == (B, Cout, H, W), out.shape

    # Reference: XLA f32 conv with identical NCHW / OIHW semantics.  The kernel
    # uses bf16 operands with f32 accumulation, so tolerances are relaxed.
    ref = jax.lax.conv_general_dilated(
        x, w_conv, window_strides=(1, 1), padding="SAME",
        dimension_numbers=("NCHW", "OIHW", "NCHW"))
    ref = jnp.maximum(ref + b_conv[None, :, None, None], 0.0)
    assert jnp.allclose(out, ref, atol=5e-2, rtol=5e-2), float(
        jnp.max(jnp.abs(out - ref)))

    # Exercise the (normally discarded) logits branch explicitly and check it
    # tightly against the Pallas features (isolating the f32 head kernel).
    feat2, logits = jax.jit(model1_forward)(x, w_conv, b_conv, w_fc, b_fc)
    logits = jax.block_until_ready(logits)
    assert logits.shape == (B, NCLS), logits.shape
    assert jnp.allclose(feat2, ref, atol=5e-2, rtol=5e-2)
    pooled_ref = jnp.mean(feat2, axis=(2, 3))
    logits_ref = pooled_ref @ w_fc + b_fc
    assert jnp.allclose(logits, logits_ref, atol=1e-3, rtol=1e-3)

    print("KERNEL_OK")
</pallas_src>

<mosaic_0001>
module attributes {stable_mosaic.version = 11 : i64} {
  func.func @conv3x3_relu_kernel(%arg0: i32, %arg1: memref<2x16x432xbf16, #tpu.memory_space<vmem>>, %arg2: memref<32x144xbf16, #tpu.memory_space<vmem>>, %arg3: memref<32x1xf32, #tpu.memory_space<vmem>>, %arg4: memref<2x32x384xf32, #tpu.memory_space<vmem>>, %arg5: memref<144x768xbf16, #tpu.memory_space<vmem>>) attributes {dimension_semantics = [#tpu.dimension_semantics<parallel>], iteration_bounds = array<i64: 1>, scalar_prefetch = 0 : i64, scratch_operands = 1 : i64, tpu.core_type = #tpu.core_type<tc>, window_params = [{transform_indices = @transform_0, window_bounds = array<i64: 2, 16, 432>}, {pipeline_mode = #tpu.pipeline_mode<synchronous>, transform_indices = @transform_1, window_bounds = array<i64: 32, 144>}, {pipeline_mode = #tpu.pipeline_mode<synchronous>, transform_indices = @transform_2, window_bounds = array<i64: 32, 1>}, {transform_indices = @transform_3, window_bounds = array<i64: 2, 32, 384>}]} {
    %c0 = arith.constant 0 : index
    %c0_0 = arith.constant 0 : index
    %c0_1 = arith.constant 0 : index
    %0 = vector.load %arg1[%c0, %c0_0, %c0_1] : memref<2x16x432xbf16, #tpu.memory_space<vmem>>, vector<1x16x384xbf16>
    %1 = vector.shape_cast %0 : vector<1x16x384xbf16> to vector<16x384xbf16>
    %c0_2 = arith.constant 0 : index
    %c0_3 = arith.constant 0 : index
    %2 = vector.load %arg5[%c0_2, %c0_3] : memref<144x768xbf16, #tpu.memory_space<vmem>>, vector<16x384xbf16>
    tpu.vector_store %arg5[%c0_2, %c0_3], %1 {strides = array<i32>} : memref<144x768xbf16, #tpu.memory_space<vmem>>, vector<16x384xbf16>,
    %c1 = arith.constant 1 : index
    %c0_4 = arith.constant 0 : index
    %c0_5 = arith.constant 0 : index
    %3 = vector.load %arg1[%c1, %c0_4, %c0_5] : memref<2x16x432xbf16, #tpu.memory_space<vmem>>, vector<1x16x384xbf16>
    %4 = vector.shape_cast %3 : vector<1x16x384xbf16> to vector<16x384xbf16>
    %c0_6 = arith.constant 0 : index
    %c384 = arith.constant 384 : index
    %5 = vector.load %arg5[%c0_6, %c384] : memref<144x768xbf16, #tpu.memory_space<vmem>>, vector<16x384xbf16>
    tpu.vector_store %arg5[%c0_6, %c384], %4 {strides = array<i32>} : memref<144x768xbf16, #tpu.memory_space<vmem>>, vector<16x384xbf16>,
    %c0_7 = arith.constant 0 : index
    %c0_8 = arith.constant 0 : index
    %c1_9 = arith.constant 1 : index
    %6 = vector.load %arg1[%c0_7, %c0_8, %c1_9] : memref<2x16x432xbf16, #tpu.memory_space<vmem>>, vector<1x16x384xbf16>
    %7 = vector.shape_cast %6 : vector<1x16x384xbf16> to vector<16x384xbf16>
    %c16 = arith.constant 16 : index
    %c0_10 = arith.constant 0 : index
    %8 = vector.load %arg5[%c16, %c0_10] : memref<144x768xbf16, #tpu.memory_space<vmem>>, vector<16x384xbf16>
    tpu.vector_store %arg5[%c16, %c0_10], %7 {strides = array<i32>} : memref<144x768xbf16, #tpu.memory_space<vmem>>, vector<16x384xbf16>,
    %c1_11 = arith.constant 1 : index
    %c0_12 = arith.constant 0 : index
    %c1_13 = arith.constant 1 : index
    %9 = vector.load %arg1[%c1_11, %c0_12, %c1_13] : memref<2x16x432xbf16, #tpu.memory_space<vmem>>, vector<1x16x384xbf16>
    %10 = vector.shape_cast %9 : vector<1x16x384xbf16> to vector<16x384xbf16>
    %c16_14 = arith.constant 16 : index
    %c384_15 = arith.constant 384 : index
    %11 = vector.load %arg5[%c16_14, %c384_15] : memref<144x768xbf16, #tpu.memory_space<vmem>>, vector<16x384xbf16>
    tpu.vector_store %arg5[%c16_14, %c384_15], %10 {strides = array<i32>} : memref<144x768xbf16, #tpu.memory_space<vmem>>, vector<16x384xbf16>,
    %c0_16 = arith.constant 0 : index
    %c0_17 = arith.constant 0 : index
    %c2 = arith.constant 2 : index
    %12 = vector.load %arg1[%c0_16, %c0_17, %c2] : memref<2x16x432xbf16, #tpu.memory_space<vmem>>, vector<1x16x384xbf16>
    %13 = vector.shape_cast %12 : vector<1x16x384xbf16> to vector<16x384xbf16>
    %c32 = arith.constant 32 : index
    %c0_18 = arith.constant 0 : index
    %14 = vector.load %arg5[%c32, %c0_18] : memref<144x768xbf16, #tpu.memory_space<vmem>>, vector<16x384xbf16>
    tpu.vector_store %arg5[%c32, %c0_18], %13 {strides = array<i32>} : memref<144x768xbf16, #tpu.memory_space<vmem>>, vector<16x384xbf16>,
    %c1_19 = arith.constant 1 : index
    %c0_20 = arith.constant 0 : index
    %c2_21 = arith.constant 2 : index
    %15 = vector.load %arg1[%c1_19, %c0_20, %c2_21] : memref<2x16x432xbf16, #tpu.memory_space<vmem>>, vector<1x16x384xbf16>
    %16 = vector.shape_cast %15 : vector<1x16x384xbf16> to vector<16x384xbf16>
    %c32_22 = arith.constant 32 : index
    %c384_23 = arith.constant 384 : index
    %17 = vector.load %arg5[%c32_22, %c384_23] : memref<144x768xbf16, #tpu.memory_space<vmem>>, vector<16x384xbf16>
    tpu.vector_store %arg5[%c32_22, %c384_23], %16 {strides = array<i32>} : memref<144x768xbf16, #tpu.memory_space<vmem>>, vector<16x384xbf16>,
    %c0_24 = arith.constant 0 : index
    %c0_25 = arith.constant 0 : index
    %c18 = arith.constant 18 : index
    %18 = vector.load %arg1[%c0_24, %c0_25, %c18] : memref<2x16x432xbf16, #tpu.memory_space<vmem>>, vector<1x16x384xbf16>
    %19 = vector.shape_cast %18 : vector<1x16x384xbf16> to vector<16x384xbf16>
    %c48 = arith.constant 48 : index
    %c0_26 = arith.constant 0 : index
    %20 = vector.load %arg5[%c48, %c0_26] : memref<144x768xbf16, #tpu.memory_space<vmem>>, vector<16x384xbf16>
    tpu.vector_store %arg5[%c48, %c0_26], %19 {strides = array<i32>} : memref<144x768xbf16, #tpu.memory_space<vmem>>, vector<16x384xbf16>,
    %c1_27 = arith.constant 1 : index
    %c0_28 = arith.constant 0 : index
    %c18_29 = arith.constant 18 : index
    %21 = vector.load %arg1[%c1_27, %c0_28, %c18_29] : memref<2x16x432xbf16, #tpu.memory_space<vmem>>, vector<1x16x384xbf16>
    %22 = vector.shape_cast %21 : vector<1x16x384xbf16> to vector<16x384xbf16>
    %c48_30 = arith.constant 48 : index
    %c384_31 = arith.constant 384 : index
    %23 = vector.load %arg5[%c48_30, %c384_31] : memref<144x768xbf16, #tpu.memory_space<vmem>>, vector<16x384xbf16>
    tpu.vector_store %arg5[%c48_30, %c384_31], %22 {strides = array<i32>} : memref<144x768xbf16, #tpu.memory_space<vmem>>, vector<16x384xbf16>,
    %c0_32 = arith.constant 0 : index
    %c0_33 = arith.constant 0 : index
    %c19 = arith.constant 19 : index
    %24 = vector.load %arg1[%c0_32, %c0_33, %c19] : memref<2x16x432xbf16, #tpu.memory_space<vmem>>, vector<1x16x384xbf16>
    %25 = vector.shape_cast %24 : vector<1x16x384xbf16> to vector<16x384xbf16>
    %c64 = arith.constant 64 : index
    %c0_34 = arith.constant 0 : index
    %26 = vector.load %arg5[%c64, %c0_34] : memref<144x768xbf16, #tpu.memory_space<vmem>>, vector<16x384xbf16>
    tpu.vector_store %arg5[%c64, %c0_34], %25 {strides = array<i32>} : memref<144x768xbf16, #tpu.memory_space<vmem>>, vector<16x384xbf16>,
    %c1_35 = arith.constant 1 : index
    %c0_36 = arith.constant 0 : index
    %c19_37 = arith.constant 19 : index
    %27 = vector.load %arg1[%c1_35, %c0_36, %c19_37] : memref<2x16x432xbf16, #tpu.memory_space<vmem>>, vector<1x16x384xbf16>
    %28 = vector.shape_cast %27 : vector<1x16x384xbf16> to vector<16x384xbf16>
    %c64_38 = arith.constant 64 : index
    %c384_39 = arith.constant 384 : index
    %29 = vector.load %arg5[%c64_38, %c384_39] : memref<144x768xbf16, #tpu.memory_space<vmem>>, vector<16x384xbf16>
    tpu.vector_store %arg5[%c64_38, %c384_39], %28 {strides = array<i32>} : memref<144x768xbf16, #tpu.memory_space<vmem>>, vector<16x384xbf16>,
    %c0_40 = arith.constant 0 : index
    %c0_41 = arith.constant 0 : index
    %c20 = arith.constant 20 : index
    %30 = vector.load %arg1[%c0_40, %c0_41, %c20] : memref<2x16x432xbf16, #tpu.memory_space<vmem>>, vector<1x16x384xbf16>
    %31 = vector.shape_cast %30 : vector<1x16x384xbf16> to vector<16x384xbf16>
    %c80 = arith.constant 80 : index
    %c0_42 = arith.constant 0 : index
    %32 = vector.load %arg5[%c80, %c0_42] : memref<144x768xbf16, #tpu.memory_space<vmem>>, vector<16x384xbf16>
    tpu.vector_store %arg5[%c80, %c0_42], %31 {strides = array<i32>} : memref<144x768xbf16, #tpu.memory_space<vmem>>, vector<16x384xbf16>,
    %c1_43 = arith.constant 1 : index
    %c0_44 = arith.constant 0 : index
    %c20_45 = arith.constant 20 : index
    %33 = vector.load %arg1[%c1_43, %c0_44, %c20_45] : memref<2x16x432xbf16, #tpu.memory_space<vmem>>, vector<1x16x384xbf16>
    %34 = vector.shape_cast %33 : vector<1x16x384xbf16> to vector<16x384xbf16>
    %c80_46 = arith.constant 80 : index
    %c384_47 = arith.constant 384 : index
    %35 = vector.load %arg5[%c80_46, %c384_47] : memref<144x768xbf16, #tpu.memory_space<vmem>>, vector<16x384xbf16>
    tpu.vector_store %arg5[%c80_46, %c384_47], %34 {strides = array<i32>} : memref<144x768xbf16, #tpu.memory_space<vmem>>, vector<16x384xbf16>,
    %c0_48 = arith.constant 0 : index
    %c0_49 = arith.constant 0 : index
    %c36 = arith.constant 36 : index
    %36 = vector.load %arg1[%c0_48, %c0_49, %c36] : memref<2x16x432xbf16, #tpu.memory_space<vmem>>, vector<1x16x384xbf16>
    %37 = vector.shape_cast %36 : vector<1x16x384xbf16> to vector<16x384xbf16>
    %c96 = arith.constant 96 : index
    %c0_50 = arith.constant 0 : index
    %38 = vector.load %arg5[%c96, %c0_50] : memref<144x768xbf16, #tpu.memory_space<vmem>>, vector<16x384xbf16>
    tpu.vector_store %arg5[%c96, %c0_50], %37 {strides = array<i32>} : memref<144x768xbf16, #tpu.memory_space<vmem>>, vector<16x384xbf16>,
    %c1_51 = arith.constant 1 : index
    %c0_52 = arith.constant 0 : index
    %c36_53 = arith.constant 36 : index
    %39 = vector.load %arg1[%c1_51, %c0_52, %c36_53] : memref<2x16x432xbf16, #tpu.memory_space<vmem>>, vector<1x16x384xbf16>
    %40 = vector.shape_cast %39 : vector<1x16x384xbf16> to vector<16x384xbf16>
    %c96_54 = arith.constant 96 : index
    %c384_55 = arith.constant 384 : index
    %41 = vector.load %arg5[%c96_54, %c384_55] : memref<144x768xbf16, #tpu.memory_space<vmem>>, vector<16x384xbf16>
    tpu.vector_store %arg5[%c96_54, %c384_55], %40 {strides = array<i32>} : memref<144x768xbf16, #tpu.memory_space<vmem>>, vector<16x384xbf16>,
    %c0_56 = arith.constant 0 : index
    %c0_57 = arith.constant 0 : index
    %c37 = arith.constant 37 : index
    %42 = vector.load %arg1[%c0_56, %c0_57, %c37] : memref<2x16x432xbf16, #tpu.memory_space<vmem>>, vector<1x16x384xbf16>
    %43 = vector.shape_cast %42 : vector<1x16x384xbf16> to vector<16x384xbf16>
    %c112 = arith.constant 112 : index
    %c0_58 = arith.constant 0 : index
    %44 = vector.load %arg5[%c112, %c0_58] : memref<144x768xbf16, #tpu.memory_space<vmem>>, vector<16x384xbf16>
    tpu.vector_store %arg5[%c112, %c0_58], %43 {strides = array<i32>} : memref<144x768xbf16, #tpu.memory_space<vmem>>, vector<16x384xbf16>,
    %c1_59 = arith.constant 1 : index
    %c0_60 = arith.constant 0 : index
    %c37_61 = arith.constant 37 : index
    %45 = vector.load %arg1[%c1_59, %c0_60, %c37_61] : memref<2x16x432xbf16, #tpu.memory_space<vmem>>, vector<1x16x384xbf16>
    %46 = vector.shape_cast %45 : vector<1x16x384xbf16> to vector<16x384xbf16>
    %c112_62 = arith.constant 112 : index
    %c384_63 = arith.constant 384 : index
    %47 = vector.load %arg5[%c112_62, %c384_63] : memref<144x768xbf16, #tpu.memory_space<vmem>>, vector<16x384xbf16>
    tpu.vector_store %arg5[%c112_62, %c384_63], %46 {strides = array<i32>} : memref<144x768xbf16, #tpu.memory_space<vmem>>, vector<16x384xbf16>,
    %c0_64 = arith.constant 0 : index
    %c0_65 = arith.constant 0 : index
    %c38 = arith.constant 38 : index
    %48 = vector.load %arg1[%c0_64, %c0_65, %c38] : memref<2x16x432xbf16, #tpu.memory_space<vmem>>, vector<1x16x384xbf16>
    %49 = vector.shape_cast %48 : vector<1x16x384xbf16> to vector<16x384xbf16>
    %c128 = arith.constant 128 : index
    %c0_66 = arith.constant 0 : index
    %50 = vector.load %arg5[%c128, %c0_66] : memref<144x768xbf16, #tpu.memory_space<vmem>>, vector<16x384xbf16>
    tpu.vector_store %arg5[%c128, %c0_66], %49 {strides = array<i32>} : memref<144x768xbf16, #tpu.memory_space<vmem>>, vector<16x384xbf16>,
    %c1_67 = arith.constant 1 : index
    %c0_68 = arith.constant 0 : index
    %c38_69 = arith.constant 38 : index
    %51 = vector.load %arg1[%c1_67, %c0_68, %c38_69] : memref<2x16x432xbf16, #tpu.memory_space<vmem>>, vector<1x16x384xbf16>
    %52 = vector.shape_cast %51 : vector<1x16x384xbf16> to vector<16x384xbf16>
    %c128_70 = arith.constant 128 : index
    %c384_71 = arith.constant 384 : index
    %53 = vector.load %arg5[%c128_70, %c384_71] : memref<144x768xbf16, #tpu.memory_space<vmem>>, vector<16x384xbf16>
    tpu.vector_store %arg5[%c128_70, %c384_71], %52 {strides = array<i32>} : memref<144x768xbf16, #tpu.memory_space<vmem>>, vector<16x384xbf16>,
    %c0_72 = arith.constant 0 : index
    %c0_73 = arith.constant 0 : index
    %54 = vector.load %arg2[%c0_72, %c0_73] : memref<32x144xbf16, #tpu.memory_space<vmem>>, vector<32x144xbf16>
    %c0_74 = arith.constant 0 : index
    %c0_75 = arith.constant 0 : index
    %55 = vector.load %arg5[%c0_74, %c0_75] : memref<144x768xbf16, #tpu.memory_space<vmem>>, vector<144x768xbf16>
    %cst = arith.constant dense<0.000000e+00> : vector<32x768xf32>
    %56 = tpu.matmul %54, %55, %cst {dimension_numbers = #tpu.dot_dimension_numbers<[1], [0], [0], [1], [0, 0, 1, 1], [], []>} : vector<32x144xbf16>, vector<144x768xbf16>, vector<32x768xf32> -> vector<32x768xf32>
    %c0_76 = arith.constant 0 : index
    %c0_77 = arith.constant 0 : index
    %57 = vector.load %arg3[%c0_76, %c0_77] : memref<32x1xf32, #tpu.memory_space<vmem>>, vector<32x1xf32>
    %58 = vector.broadcast %57 : vector<32x1xf32> to vector<32x768xf32>
    %59 = arith.addf %56, %58 : vector<32x768xf32>
    %cst_78 = arith.constant 0.000000e+00 : f32
    %60 = vector.broadcast %cst_78 : f32 to vector<32x768xf32>
    %61 = arith.maximumf %59, %60 : vector<32x768xf32>
    %62 = vector.extract_strided_slice %61 {offsets = [0, 0], sizes = [32, 384], strides = [1, 1]} : vector<32x768xf32> to vector<32x384xf32>
    %c0_79 = arith.constant 0 : index
    %c0_80 = arith.constant 0 : index
    %c0_81 = arith.constant 0 : index
    %63 = vector.load %arg4[%c0_79, %c0_80, %c0_81] : memref<2x32x384xf32, #tpu.memory_space<vmem>>, vector<1x32x384xf32>
    %64 = vector.shape_cast %63 : vector<1x32x384xf32> to vector<32x384xf32>
    %65 = vector.shape_cast %62 : vector<32x384xf32> to vector<1x32x384xf32>
    tpu.vector_store %arg4[%c0_79, %c0_80, %c0_81], %65 {strides = array<i32>} : memref<2x32x384xf32, #tpu.memory_space<vmem>>, vector<1x32x384xf32>,
    %66 = vector.extract_strided_slice %61 {offsets = [0, 384], sizes = [32, 384], strides = [1, 1]} : vector<32x768xf32> to vector<32x384xf32>
    %c1_82 = arith.constant 1 : index
    %c0_83 = arith.constant 0 : index
    %c0_84 = arith.constant 0 : index
    %67 = vector.load %arg4[%c1_82, %c0_83, %c0_84] : memref<2x32x384xf32, #tpu.memory_space<vmem>>, vector<1x32x384xf32>
    %68 = vector.shape_cast %67 : vector<1x32x384xf32> to vector<32x384xf32>
    %69 = vector.shape_cast %66 : vector<32x384xf32> to vector<1x32x384xf32>
    tpu.vector_store %arg4[%c1_82, %c0_83, %c0_84], %69 {strides = array<i32>} : memref<2x32x384xf32, #tpu.memory_space<vmem>>, vector<1x32x384xf32>,
    return
  }
  func.func @transform_0(%arg0: i32) -> (i32, i32, i32) {
    %c0_i32 = arith.constant 0 : i32
    %c0_i32_0 = arith.constant 0 : i32
    %c0_i32_1 = arith.constant 0 : i32
    return %arg0, %c0_i32, %c0_i32_0 : i32, i32, i32
  }
  func.func @transform_1(%arg0: i32) -> (i32, i32) {
    %c0_i32 = arith.constant 0 : i32
    %c0_i32_0 = arith.constant 0 : i32
    %c0_i32_1 = arith.constant 0 : i32
    return %c0_i32, %c0_i32_0 : i32, i32
  }
  func.func @transform_2(%arg0: i32) -> (i32, i32) {
    %c0_i32 = arith.constant 0 : i32
    %c0_i32_0 = arith.constant 0 : i32
    %c0_i32_1 = arith.constant 0 : i32
    return %c0_i32, %c0_i32_0 : i32, i32
  }
  func.func @transform_3(%arg0: i32) -> (i32, i32, i32) {
    %c0_i32 = arith.constant 0 : i32
    %c0_i32_0 = arith.constant 0 : i32
    %c0_i32_1 = arith.constant 0 : i32
    return %arg0, %c0_i32, %c0_i32_0 : i32, i32, i32
  }
}

</mosaic_0001>

<llo_original>
// kernel: res_gen_forward.1
$region0: #{res_gen_forward.1}
  #allocation0 [shape = 'u32[]', space=smem, size = 0x4, offset = 0x4, fixed_abs, tag = 'smem constant byte address 0x4 - core index']
  #allocation1 [shape = 'u32[144,128]{1,0:T(1,128)}', space=vmem, size = 0x12000, scoped, tag = 'internal scratch']
  #allocation2 [shape = 'bf16[144,768]{1,0:T(8,128)(2,1)}', space=vmem, size = 0x36000, scoped, tag = 'scratch operand']
  %s0 = inlined_call_operand.vmem [shape: bf16[2,16,432], index: 0, kind: input, shape index: {}]
  %s1 = inlined_call_operand.vmem [shape: bf16[32,144], index: 1, kind: input, shape index: {}]
  %s2 = inlined_call_operand.vmem [shape: f32[32,1], index: 2, kind: input, shape index: {}]
  %s3 = inlined_call_operand.vmem [shape: f32[2,32,384], index: 3, kind: output, shape index: {}]
  %s4 = sld [smem:[#allocation0]]
  $region22: #{res_gen_forward.1} parent=0
    _
  %s6 = ssub.s32 1, %s4
  %s7 = scalar_select 0, %s6, %s4
  // Predicated region
  $region2: #{res_gen_forward.1} parent=0 // pred_check
    _
  $region3: #{res_gen_forward.1} parent=0 // pred_check_branch
    %9 = sbr.rel (0) target = $region5
  $region4: #{res_gen_forward.1} parent=0 // pred_region
    _
  $region5: #{res_gen_forward.1} parent=0 // pred_fallthru
    _
  // Predicated region
  $region6: #{res_gen_forward.1} parent=0 // pred_check
    _
  $region7: #{res_gen_forward.1} parent=0 // pred_check_branch
    %11 = sbr.rel (0) target = $region9
  $region8: #{res_gen_forward.1} parent=0 // pred_region
    _
  $region9: #{res_gen_forward.1} parent=0 // pred_fallthru
    _
  // Predicated region
  $region10: #{res_gen_forward.1} parent=0 // pred_check
    _
  $region11: #{res_gen_forward.1} parent=0 // pred_check_branch
    %13 = sbr.rel (0) target = $region13
  $region12: #{res_gen_forward.1} parent=0 // pred_region
    _
  $region13: #{res_gen_forward.1} parent=0 // pred_fallthru
    _
  %v15 = vld [vmem:[%s0] sm:$0xff]
  %v16 = vld [vmem:[%s0 + $0x8] sm:$0xf]
  %v17 = vld [vmem:[%s0 + $0x10] sm:$0xff]
  %v18 = vld [vmem:[%s0 + $0x18] sm:$0xf]
  %19 = vst [vmem:[#allocation2] sm:$0xff] %v15
  %20 = vst [vmem:[#allocation2 + $0x8] sm:$0xf] %v16
  %21 = vst [vmem:[#allocation2 + $0x18] sm:$0xff] %v17
  %22 = vst [vmem:[#allocation2 + $0x20] sm:$0xf] %v18
  %s23 = scalar_lea.vmem %s0, 32
  %v24 = vld [vmem:[%s23] sm:$0xff]
  %v25 = vld [vmem:[%s23 + $0x8] sm:$0xf]
  %v26 = vld [vmem:[%s23 + $0x10] sm:$0xff]
  %v27 = vld [vmem:[%s23 + $0x18] sm:$0xf]
  %28 = vst [vmem:[#allocation2 + $0xc] sm:$0xff] %v24
  %29 = vst [vmem:[#allocation2 + $0x14] sm:$0xf] %v25
  %30 = vst [vmem:[#allocation2 + $0x24] sm:$0xff] %v26
  %31 = vst [vmem:[#allocation2 + $0x2c] sm:$0xf] %v27
  %v32 = vld [vmem:[%s0] sm:$0xff]
  %v33 = vld [vmem:[%s0 + $0x8] sm:$0xff]
  %v34 = vld [vmem:[%s0 + $0x10] sm:$0xff]
  %v35 = vld [vmem:[%s0 + $0x18] sm:$0xff]
  %40 = vrot.lane.b32.xlu0 %v32, 127
  %v41 = vpop.permute.xlu0 %40
  %42 = vrot.lane.b32.xlu0 %v33, 127
  %v43 = vpop.permute.xlu0 %42
  %44 = vrot.lane.b32.xlu0 %v34, 127
  %v45 = vpop.permute.xlu0 %44
  %46 = vrot.lane.b32.xlu0 %v35, 127
  %v47 = vpop.permute.xlu0 %46
  %v48 = vrot.slane %v41, 4
  %v49 = vrot.slane %v43, 4
  %v50 = vrot.slane %v45, 4
  %v51 = vrot.slane %v47, 4
  %vm52 = vcmask 1043456
  %v53 = vsel %vm52, %v48, %v49
  %vm54 = vcmask 1039360
  %v55 = vsel %vm54, %v41, %v53
  %v56 = vsel %vm54, %v43, %v49
  %v57 = vsel %vm52, %v50, %v51
  %v58 = vsel %vm54, %v45, %v57
  %v59 = vsel %vm54, %v47, %v51
  %64 = vst [vmem:[#allocation2 + $0x30] sm:$0xff] %v55
  %65 = vst [vmem:[#allocation2 + $0x38] sm:$0xf] %v56
  %66 = vst [vmem:[#allocation2 + $0x48] sm:$0xff] %v58
  %67 = vst [vmem:[#allocation2 + $0x50] sm:$0xf] %v59
  %v68 = vld [vmem:[%s23] sm:$0xff]
  %v69 = vld [vmem:[%s23 + $0x8] sm:$0xff]
  %v70 = vld [vmem:[%s23 + $0x10] sm:$0xff]
  %v71 = vld [vmem:[%s23 + $0x18] sm:$0xff]
  %76 = vrot.lane.b32.xlu0 %v68, 127
  %v77 = vpop.permute.xlu0 %76
  %78 = vrot.lane.b32.xlu0 %v69, 127
  %v79 = vpop.permute.xlu0 %78
  %80 = vrot.lane.b32.xlu0 %v70, 127
  %v81 = vpop.permute.xlu0 %80
  %82 = vrot.lane.b32.xlu0 %v71, 127
  %v83 = vpop.permute.xlu0 %82
  %v84 = vrot.slane %v77, 4
  %v85 = vrot.slane %v79, 4
  %v86 = vrot.slane %v81, 4
  %v87 = vrot.slane %v83, 4
  %v88 = vsel %vm52, %v84, %v85
  %v89 = vsel %vm54, %v77, %v88
  %v90 = vsel %vm54, %v79, %v85
  %v91 = vsel %vm52, %v86, %v87
  %v92 = vsel %vm54, %v81, %v91
  %v93 = vsel %vm54, %v83, %v87
  %98 = vst [vmem:[#allocation2 + $0x3c] sm:$0xff] %v89
  %99 = vst [vmem:[#allocation2 + $0x44] sm:$0xf] %v90
  %100 = vst [vmem:[#allocation2 + $0x54] sm:$0xff] %v92
  %101 = vst [vmem:[#allocation2 + $0x5c] sm:$0xf] %v93
  %v102 = vld [vmem:[%s0] sm:$0xff]
  %v103 = vld [vmem:[%s0 + $0x8] sm:$0xff]
  %v104 = vld [vmem:[%s0 + $0x10] sm:$0xff]
  %v105 = vld [vmem:[%s0 + $0x18] sm:$0xff]
  %110 = vrot.lane.b32.xlu0 %v102, 126
  %v111 = vpop.permute.xlu0 %110
  %112 = vrot.lane.b32.xlu0 %v103, 126
  %v113 = vpop.permute.xlu0 %112
  %114 = vrot.lane.b32.xlu0 %v104, 126
  %v115 = vpop.permute.xlu0 %114
  %116 = vrot.lane.b32.xlu0 %v105, 126
  %v117 = vpop.permute.xlu0 %116
  %v118 = vrot.slane %v111, 4
  %v119 = vrot.slane %v113, 4
  %v120 = vrot.slane %v115, 4
  %v121 = vrot.slane %v117, 4
  %v122 = vsel %vm52, %v118, %v119
  %vm123 = vcmask 1031168
  %v124 = vsel %vm123, %v111, %v122
  %v125 = vsel %vm123, %v113, %v119
  %v126 = vsel %vm52, %v120, %v121
  %v127 = vsel %vm123, %v115, %v126
  %v128 = vsel %vm123, %v117, %v121
  %133 = vst [vmem:[#allocation2 + $0x60] sm:$0xff] %v124
  %134 = vst [vmem:[#allocation2 + $0x68] sm:$0xf] %v125
  %135 = vst [vmem:[#allocation2 + $0x78] sm:$0xff] %v127
  %136 = vst [vmem:[#allocation2 + $0x80] sm:$0xf] %v128
  %v137 = vld [vmem:[%s23] sm:$0xff]
  %v138 = vld [vmem:[%s23 + $0x8] sm:$0xff]
  %v139 = vld [vmem:[%s23 + $0x10] sm:$0xff]
  %v140 = vld [vmem:[%s23 + $0x18] sm:$0xff]
  %145 = vrot.lane.b32.xlu0 %v137, 126
  %v146 = vpop.permute.xlu0 %145
  %147 = vrot.lane.b32.xlu0 %v138, 126
  %v148 = vpop.permute.xlu0 %147
  %149 = vrot.lane.b32.xlu0 %v139, 126
  %v150 = vpop.permute.xlu0 %149
  %151 = vrot.lane.b32.xlu0 %v140, 126
  %v152 = vpop.permute.xlu0 %151
  %v153 = vrot.slane %v146, 4
  %v154 = vrot.slane %v148, 4
  %v155 = vrot.slane %v150, 4
  %v156 = vrot.slane %v152, 4
  %v157 = vsel %vm52, %v153, %v154
  %v158 = vsel %vm123, %v146, %v157
  %v159 = vsel %vm123, %v148, %v154
  %v160 = vsel %vm52, %v155, %v156
  %v161 = vsel %vm123, %v150, %v160
  %v162 = vsel %vm123, %v152, %v156
  %167 = vst [vmem:[#allocation2 + $0x6c] sm:$0xff] %v158
  %168 = vst [vmem:[#allocation2 + $0x74] sm:$0xf] %v159
  %169 = vst [vmem:[#allocation2 + $0x84] sm:$0xff] %v161
  %170 = vst [vmem:[#allocation2 + $0x8c] sm:$0xf] %v162
  %v171 = vld [vmem:[%s0] sm:$0xff]
  %v172 = vld [vmem:[%s0 + $0x8] sm:$0xff]
  %v173 = vld [vmem:[%s0 + $0x10] sm:$0xff]
  %v174 = vld [vmem:[%s0 + $0x18] sm:$0xff]
  %179 = vrot.lane.b32.xlu0 %v171, 110
  %v180 = vpop.permute.xlu0 %179
  %181 = vrot.lane.b32.xlu0 %v172, 110
  %v182 = vpop.permute.xlu0 %181
  %183 = vrot.lane.b32.xlu0 %v173, 110
  %v184 = vpop.permute.xlu0 %183
  %185 = vrot.lane.b32.xlu0 %v174, 110
  %v186 = vpop.permute.xlu0 %185
  %v187 = vrot.slane %v180, 4
  %v188 = vrot.slane %v182, 4
  %v189 = vrot.slane %v184, 4
  %v190 = vrot.slane %v186, 4
  %v191 = vsel %vm52, %v187, %v188
  %vm192 = vcmask 900096
  %v193 = vsel %vm192, %v180, %v191
  %v194 = vsel %vm192, %v182, %v188
  %v195 = vsel %vm52, %v189, %v190
  %v196 = vsel %vm192, %v184, %v195
  %v197 = vsel %vm192, %v186, %v190
  %202 = vst [vmem:[#allocation2 + $0x90] sm:$0xff] %v193
  %203 = vst [vmem:[#allocation2 + $0x98] sm:$0xf] %v194
  %204 = vst [vmem:[#allocation2 + $0xa8] sm:$0xff] %v196
  %205 = vst [vmem:[#allocation2 + $0xb0] sm:$0xf] %v197
  %v206 = vld [vmem:[%s23] sm:$0xff]
  %v207 = vld [vmem:[%s23 + $0x8] sm:$0xff]
  %v208 = vld [vmem:[%s23 + $0x10] sm:$0xff]
  %v209 = vld [vmem:[%s23 + $0x18] sm:$0xff]
  %214 = vrot.lane.b32.xlu0 %v206, 110
  %v215 = vpop.permute.xlu0 %214
  %216 = vrot.lane.b32.xlu0 %v207, 110
  %v217 = vpop.permute.xlu0 %216
  %218 = vrot.lane.b32.xlu0 %v208, 110
  %v219 = vpop.permute.xlu0 %218
  %220 = vrot.lane.b32.xlu0 %v209, 110
  %v221 = vpop.permute.xlu0 %220
  %v222 = vrot.slane %v215, 4
  %v223 = vrot.slane %v217, 4
  %v224 = vrot.slane %v219, 4
  %v225 = vrot.slane %v221, 4
  %v226 = vsel %vm52, %v222, %v223
  %v227 = vsel %vm192, %v215, %v226
  %v228 = vsel %vm192, %v217, %v223
  %v229 = vsel %vm52, %v224, %v225
  %v230 = vsel %vm192, %v219, %v229
  %v231 = vsel %vm192, %v221, %v225
  %236 = vst [vmem:[#allocation2 + $0x9c] sm:$0xff] %v227
  %237 = vst [vmem:[#allocation2 + $0xa4] sm:$0xf] %v228
  %238 = vst [vmem:[#allocation2 + $0xb4] sm:$0xff] %v230
  %239 = vst [vmem:[#allocation2 + $0xbc] sm:$0xf] %v231
  %v240 = vld [vmem:[%s0] sm:$0xff]
  %v241 = vld [vmem:[%s0 + $0x8] sm:$0xff]
  %v242 = vld [vmem:[%s0 + $0x10] sm:$0xff]
  %v243 = vld [vmem:[%s0 + $0x18] sm:$0xff]
  %248 = vrot.lane.b32.xlu0 %v240, 109
  %v249 = vpop.permute.xlu0 %248
  %250 = vrot.lane.b32.xlu0 %v241, 109
  %v251 = vpop.permute.xlu0 %250
  %252 = vrot.lane.b32.xlu0 %v242, 109
  %v253 = vpop.permute.xlu0 %252
  %254 = vrot.lane.b32.xlu0 %v243, 109
  %v255 = vpop.permute.xlu0 %254
  %v256 = vrot.slane %v249, 4
  %v257 = vrot.slane %v251, 4
  %v258 = vrot.slane %v253, 4
  %v259 = vrot.slane %v255, 4
  %v260 = vsel %vm52, %v256, %v257
  %vm261 = vcmask 891904
  %v262 = vsel %vm261, %v249, %v260
  %v263 = vsel %vm261, %v251, %v257
  %v264 = vsel %vm52, %v258, %v259
  %v265 = vsel %vm261, %v253, %v264
  %v266 = vsel %vm261, %v255, %v259
  %271 = vst [vmem:[#allocation2 + $0xc0] sm:$0xff] %v262
  %272 = vst [vmem:[#allocation2 + $0xc8] sm:$0xf] %v263
  %273 = vst [vmem:[#allocation2 + $0xd8] sm:$0xff] %v265
  %274 = vst [vmem:[#allocation2 + $0xe0] sm:$0xf] %v266
  %v275 = vld [vmem:[%s23] sm:$0xff]
  %v276 = vld [vmem:[%s23 + $0x8] sm:$0xff]
  %v277 = vld [vmem:[%s23 + $0x10] sm:$0xff]
  %v278 = vld [vmem:[%s23 + $0x18] sm:$0xff]
  %283 = vrot.lane.b32.xlu0 %v275, 109
  %v284 = vpop.permute.xlu0 %283
  %285 = vrot.lane.b32.xlu0 %v276, 109
  %v286 = vpop.permute.xlu0 %285
  %287 = vrot.lane.b32.xlu0 %v277, 109
  %v288 = vpop.permute.xlu0 %287
  %289 = vrot.lane.b32.xlu0 %v278, 109
  %v290 = vpop.permute.xlu0 %289
  %v291 = vrot.slane %v284, 4
  %v292 = vrot.slane %v286, 4
  %v293 = vrot.slane %v288, 4
  %v294 = vrot.slane %v290, 4
  %v295 = vsel %vm52, %v291, %v292
  %v296 = vsel %vm261, %v284, %v295
  %v297 = vsel %vm261, %v286, %v292
  %v298 = vsel %vm52, %v293, %v294
  %v299 = vsel %vm261, %v288, %v298
  %v300 = vsel %vm261, %v290, %v294
  %305 = vst [vmem:[#allocation2 + $0xcc] sm:$0xff] %v296
  %306 = vst [vmem:[#allocation2 + $0xd4] sm:$0xf] %v297
  %307 = vst [vmem:[#allocation2 + $0xe4] sm:$0xff] %v299
  %308 = vst [vmem:[#allocation2 + $0xec] sm:$0xf] %v300
  %v309 = vld [vmem:[%s0] sm:$0xff]
  %v310 = vld [vmem:[%s0 + $0x8] sm:$0xff]
  %v311 = vld [vmem:[%s0 + $0x10] sm:$0xff]
  %v312 = vld [vmem:[%s0 + $0x18] sm:$0xff]
  %317 = vrot.lane.b32.xlu0 %v309, 108
  %v318 = vpop.permute.xlu0 %317
  %319 = vrot.lane.b32.xlu0 %v310, 108
  %v320 = vpop.permute.xlu0 %319
  %321 = vrot.lane.b32.xlu0 %v311, 108
  %v322 = vpop.permute.xlu0 %321
  %323 = vrot.lane.b32.xlu0 %v312, 108
  %v324 = vpop.permute.xlu0 %323
  %v325 = vrot.slane %v318, 4
  %v326 = vrot.slane %v320, 4
  %v327 = vrot.slane %v322, 4
  %v328 = vrot.slane %v324, 4
  %v329 = vsel %vm52, %v325, %v326
  %vm330 = vcmask 883712
  %v331 = vsel %vm330, %v318, %v329
  %v332 = vsel %vm330, %v320, %v326
  %v333 = vsel %vm52, %v327, %v328
  %v334 = vsel %vm330, %v322, %v333
  %v335 = vsel %vm330, %v324, %v328
  %340 = vst [vmem:[#allocation2 + $0xf0] sm:$0xff] %v331
  %341 = vst [vmem:[#allocation2 + $0xf8] sm:$0xf] %v332
  %342 = vst [vmem:[#allocation2 + $0x108] sm:$0xff] %v334
  %343 = vst [vmem:[#allocation2 + $0x110] sm:$0xf] %v335
  %v344 = vld [vmem:[%s23] sm:$0xff]
  %v345 = vld [vmem:[%s23 + $0x8] sm:$0xff]
  %v346 = vld [vmem:[%s23 + $0x10] sm:$0xff]
  %v347 = vld [vmem:[%s23 + $0x18] sm:$0xff]
  %352 = vrot.lane.b32.xlu0 %v344, 108
  %v353 = vpop.permute.xlu0 %352
  %354 = vrot.lane.b32.xlu0 %v345, 108
  %v355 = vpop.permute.xlu0 %354
  %356 = vrot.lane.b32.xlu0 %v346, 108
  %v357 = vpop.permute.xlu0 %356
  %358 = vrot.lane.b32.xlu0 %v347, 108
  %v359 = vpop.permute.xlu0 %358
  %v360 = vrot.slane %v353, 4
  %v361 = vrot.slane %v355, 4
  %v362 = vrot.slane %v357, 4
  %v363 = vrot.slane %v359, 4
  %v364 = vsel %vm52, %v360, %v361
  %v365 = vsel %vm330, %v353, %v364
  %v366 = vsel %vm330, %v355, %v361
  %v367 = vsel %vm52, %v362, %v363
  %v368 = vsel %vm330, %v357, %v367
  %v369 = vsel %vm330, %v359, %v363
  %374 = vst [vmem:[#allocation2 + $0xfc] sm:$0xff] %v365
  %375 = vst [vmem:[#allocation2 + $0x104] sm:$0xf] %v366
  %376 = vst [vmem:[#allocation2 + $0x114] sm:$0xff] %v368
  %377 = vst [vmem:[#allocation2 + $0x11c] sm:$0xf] %v369
  %v378 = vld [vmem:[%s0] sm:$0xff]
  %v379 = vld [vmem:[%s0 + $0x8] sm:$0xff]
  %v380 = vld [vmem:[%s0 + $0x10] sm:$0xff]
  %v381 = vld [vmem:[%s0 + $0x18] sm:$0xff]
  %386 = vrot.lane.b32.xlu0 %v378, 92
  %v387 = vpop.permute.xlu0 %386
  %388 = vrot.lane.b32.xlu0 %v379, 92
  %v389 = vpop.permute.xlu0 %388
  %390 = vrot.lane.b32.xlu0 %v380, 92
  %v391 = vpop.permute.xlu0 %390
  %392 = vrot.lane.b32.xlu0 %v381, 92
  %v393 = vpop.permute.xlu0 %392
  %v394 = vrot.slane %v387, 4
  %v395 = vrot.slane %v389, 4
  %v396 = vrot.slane %v391, 4
  %v397 = vrot.slane %v393, 4
  %v398 = vsel %vm52, %v394, %v395
  %vm399 = vcmask 752640
  %v400 = vsel %vm399, %v387, %v398
  %v401 = vsel %vm399, %v389, %v395
  %v402 = vsel %vm52, %v396, %v397
  %v403 = vsel %vm399, %v391, %v402
  %v404 = vsel %vm399, %v393, %v397
  %409 = vst [vmem:[#allocation2 + $0x120] sm:$0xff] %v400
  %410 = vst [vmem:[#allocation2 + $0x128] sm:$0xf] %v401
  %411 = vst [vmem:[#allocation2 + $0x138] sm:$0xff] %v403
  %412 = vst [vmem:[#allocation2 + $0x140] sm:$0xf] %v404
  %v413 = vld [vmem:[%s23] sm:$0xff]
  %v414 = vld [vmem:[%s23 + $0x8] sm:$0xff]
  %v415 = vld [vmem:[%s23 + $0x10] sm:$0xff]
  %v416 = vld [vmem:[%s23 + $0x18] sm:$0xff]
  %421 = vrot.lane.b32.xlu0 %v413, 92
  %v422 = vpop.permute.xlu0 %421
  %423 = vrot.lane.b32.xlu0 %v414, 92
  %v424 = vpop.permute.xlu0 %423
  %425 = vrot.lane.b32.xlu0 %v415, 92
  %v426 = vpop.permute.xlu0 %425
  %427 = vrot.lane.b32.xlu0 %v416, 92
  %v428 = vpop.permute.xlu0 %427
  %v429 = vrot.slane %v422, 4
  %v430 = vrot.slane %v424, 4
  %v431 = vrot.slane %v426, 4
  %v432 = vrot.slane %v428, 4
  %v433 = vsel %vm52, %v429, %v430
  %v434 = vsel %vm399, %v422, %v433
  %v435 = vsel %vm399, %v424, %v430
  %v436 = vsel %vm52, %v431, %v432
  %v437 = vsel %vm399, %v426, %v436
  %v438 = vsel %vm399, %v428, %v432
  %443 = vst [vmem:[#allocation2 + $0x12c] sm:$0xff] %v434
  %444 = vst [vmem:[#allocation2 + $0x134] sm:$0xf] %v435
  %445 = vst [vmem:[#allocation2 + $0x144] sm:$0xff] %v437
  %446 = vst [vmem:[#allocation2 + $0x14c] sm:$0xf] %v438
  %v447 = vld [vmem:[%s0] sm:$0xff]
  %v448 = vld [vmem:[%s0 + $0x8] sm:$0xff]
  %v449 = vld [vmem:[%s0 + $0x10] sm:$0xff]
  %v450 = vld [vmem:[%s0 + $0x18] sm:$0xff]
  %455 = vrot.lane.b32.xlu0 %v447, 91
  %v456 = vpop.permute.xlu0 %455
  %457 = vrot.lane.b32.xlu0 %v448, 91
  %v458 = vpop.permute.xlu0 %457
  %459 = vrot.lane.b32.xlu0 %v449, 91
  %v460 = vpop.permute.xlu0 %459
  %461 = vrot.lane.b32.xlu0 %v450, 91
  %v462 = vpop.permute.xlu0 %461
  %v463 = vrot.slane %v456, 4
  %v464 = vrot.slane %v458, 4
  %v465 = vrot.slane %v460, 4
  %v466 = vrot.slane %v462, 4
  %v467 = vsel %vm52, %v463, %v464
  %vm468 = vcmask 744448
  %v469 = vsel %vm468, %v456, %v467
  %v470 = vsel %vm468, %v458, %v464
  %v471 = vsel %vm52, %v465, %v466
  %v472 = vsel %vm468, %v460, %v471
  %v473 = vsel %vm468, %v462, %v466
  %478 = vst [vmem:[#allocation2 + $0x150] sm:$0xff] %v469
  %479 = vst [vmem:[#allocation2 + $0x158] sm:$0xf] %v470
  %480 = vst [vmem:[#allocation2 + $0x168] sm:$0xff] %v472
  %481 = vst [vmem:[#allocation2 + $0x170] sm:$0xf] %v473
  %v482 = vld [vmem:[%s23] sm:$0xff]
  %v483 = vld [vmem:[%s23 + $0x8] sm:$0xff]
  %v484 = vld [vmem:[%s23 + $0x10] sm:$0xff]
  %v485 = vld [vmem:[%s23 + $0x18] sm:$0xff]
  %490 = vrot.lane.b32.xlu0 %v482, 91
  %v491 = vpop.permute.xlu0 %490
  %492 = vrot.lane.b32.xlu0 %v483, 91
  %v493 = vpop.permute.xlu0 %492
  %494 = vrot.lane.b32.xlu0 %v484, 91
  %v495 = vpop.permute.xlu0 %494
  %496 = vrot.lane.b32.xlu0 %v485, 91
  %v497 = vpop.permute.xlu0 %496
  %v498 = vrot.slane %v491, 4
  %v499 = vrot.slane %v493, 4
  %v500 = vrot.slane %v495, 4
  %v501 = vrot.slane %v497, 4
  %v502 = vsel %vm52, %v498, %v499
  %v503 = vsel %vm468, %v491, %v502
  %v504 = vsel %vm468, %v493, %v499
  %v505 = vsel %vm52, %v500, %v501
  %v506 = vsel %vm468, %v495, %v505
  %v507 = vsel %vm468, %v497, %v501
  %512 = vst [vmem:[#allocation2 + $0x15c] sm:$0xff] %v503
  %513 = vst [vmem:[#allocation2 + $0x164] sm:$0xf] %v504
  %514 = vst [vmem:[#allocation2 + $0x174] sm:$0xff] %v506
  %515 = vst [vmem:[#allocation2 + $0x17c] sm:$0xf] %v507
  %v516 = vld [vmem:[%s0] sm:$0xff]
  %v517 = vld [vmem:[%s0 + $0x8] sm:$0xff]
  %v518 = vld [vmem:[%s0 + $0x10] sm:$0xff]
  %v519 = vld [vmem:[%s0 + $0x18] sm:$0xff]
  %524 = vrot.lane.b32.xlu0 %v516, 90
  %v525 = vpop.permute.xlu0 %524
  %526 = vrot.lane.b32.xlu0 %v517, 90
  %v527 = vpop.permute.xlu0 %526
  %528 = vrot.lane.b32.xlu0 %v518, 90
  %v529 = vpop.permute.xlu0 %528
  %530 = vrot.lane.b32.xlu0 %v519, 90
  %v531 = vpop.permute.xlu0 %530
  %v532 = vrot.slane %v525, 4
  %v533 = vrot.slane %v527, 4
  %v534 = vrot.slane %v529, 4
  %v535 = vrot.slane %v531, 4
  %v536 = vsel %vm52, %v532, %v533
  %vm537 = vcmask 736256
  %v538 = vsel %vm537, %v525, %v536
  %v539 = vsel %vm537, %v527, %v533
  %v540 = vsel %vm52, %v534, %v535
  %v541 = vsel %vm537, %v529, %v540
  %v542 = vsel %vm537, %v531, %v535
  %547 = vst [vmem:[#allocation2 + $0x180] sm:$0xff] %v538
  %548 = vst [vmem:[#allocation2 + $0x188] sm:$0xf] %v539
  %549 = vst [vmem:[#allocation2 + $0x198] sm:$0xff] %v541
  %550 = vst [vmem:[#allocation2 + $0x1a0] sm:$0xf] %v542
  %v551 = vld [vmem:[%s23] sm:$0xff]
  %v552 = vld [vmem:[%s23 + $0x8] sm:$0xff]
  %v553 = vld [vmem:[%s23 + $0x10] sm:$0xff]
  %v554 = vld [vmem:[%s23 + $0x18] sm:$0xff]
  %559 = vrot.lane.b32.xlu0 %v551, 90
  %v560 = vpop.permute.xlu0 %559
  %561 = vrot.lane.b32.xlu0 %v552, 90
  %v562 = vpop.permute.xlu0 %561
  %563 = vrot.lane.b32.xlu0 %v553, 90
  %v564 = vpop.permute.xlu0 %563
  %565 = vrot.lane.b32.xlu0 %v554, 90
  %v566 = vpop.permute.xlu0 %565
  %v567 = vrot.slane %v560, 4
  %v568 = vrot.slane %v562, 4
  %v569 = vrot.slane %v564, 4
  %v570 = vrot.slane %v566, 4
  %v571 = vsel %vm52, %v567, %v568
  %v572 = vsel %vm537, %v560, %v571
  %v573 = vsel %vm537, %v562, %v568
  %v574 = vsel %vm52, %v569, %v570
  %v575 = vsel %vm537, %v564, %v574
  %v576 = vsel %vm537, %v566, %v570
  %581 = vst [vmem:[#allocation2 + $0x18c] sm:$0xff] %v572
  %582 = vst [vmem:[#allocation2 + $0x194] sm:$0xf] %v573
  %583 = vst [vmem:[#allocation2 + $0x1a4] sm:$0xff] %v575
  %584 = vst [vmem:[#allocation2 + $0x1ac] sm:$0xf] %v576
  %v585 = vld [vmem:[%s1] sm:$0xff]
  %v586 = vld [vmem:[%s1 + $0x8] sm:$0xff]
  %v587 = vld [vmem:[%s1 + $0x10] sm:$0xff]
  %v588 = vld [vmem:[%s1 + $0x18] sm:$0xff]
  %v589 = vld [vmem:[#allocation2] sm:$0xff]
  %v590 = vld [vmem:[#allocation2 + $0x8] sm:$0xff]
  %v591 = vld [vmem:[#allocation2 + $0x10] sm:$0xff]
  %v592 = vld [vmem:[#allocation2 + $0x18] sm:$0xff]
  %v593 = vld [vmem:[#allocation2 + $0x20] sm:$0xff]
  %v594 = vld [vmem:[#allocation2 + $0x28] sm:$0xff]
  %v595 = vld [vmem:[#allocation2 + $0x30] sm:$0xff]
  %v596 = vld [vmem:[#allocation2 + $0x38] sm:$0xff]
  %v597 = vld [vmem:[#allocation2 + $0x40] sm:$0xff]
  %v598 = vld [vmem:[#allocation2 + $0x48] sm:$0xff]
  %v599 = vld [vmem:[#allocation2 + $0x50] sm:$0xff]
  %v600 = vld [vmem:[#allocation2 + $0x58] sm:$0xff]
  %v601 = vld [vmem:[#allocation2 + $0x60] sm:$0xff]
  %v602 = vld [vmem:[#allocation2 + $0x68] sm:$0xff]
  %v603 = vld [vmem:[#allocation2 + $0x70] sm:$0xff]
  %v604 = vld [vmem:[#allocation2 + $0x78] sm:$0xff]
  %v605 = vld [vmem:[#allocation2 + $0x80] sm:$0xff]
  %v606 = vld [vmem:[#allocation2 + $0x88] sm:$0xff]
  %v607 = vld [vmem:[#allocation2 + $0x90] sm:$0xff]
  %v608 = vld [vmem:[#allocation2 + $0x98] sm:$0xff]
  %v609 = vld [vmem:[#allocation2 + $0xa0] sm:$0xff]
  %v610 = vld [vmem:[#allocation2 + $0xa8] sm:$0xff]
  %v611 = vld [vmem:[#allocation2 + $0xb0] sm:$0xff]
  %v612 = vld [vmem:[#allocation2 + $0xb8] sm:$0xff]
  %v613 = vld [vmem:[#allocation2 + $0xc0] sm:$0xff]
  %v614 = vld [vmem:[#allocation2 + $0xc8] sm:$0xff]
  %v615 = vld [vmem:[#allocation2 + $0xd0] sm:$0xff]
  %v616 = vld [vmem:[#allocation2 + $0xd8] sm:$0xff]
  %v617 = vld [vmem:[#allocation2 + $0xe0] sm:$0xff]
  %v618 = vld [vmem:[#allocation2 + $0xe8] sm:$0xff]
  %v619 = vld [vmem:[#allocation2 + $0xf0] sm:$0xff]
  %v620 = vld [vmem:[#allocation2 + $0xf8] sm:$0xff]
  %v621 = vld [vmem:[#allocation2 + $0x100] sm:$0xff]
  %v622 = vld [vmem:[#allocation2 + $0x108] sm:$0xff]
  %v623 = vld [vmem:[#allocation2 + $0x110] sm:$0xff]
  %v624 = vld [vmem:[#allocation2 + $0x118] sm:$0xff]
  %v625 = vld [vmem:[#allocation2 + $0x120] sm:$0xff]
  %v626 = vld [vmem:[#allocation2 + $0x128] sm:$0xff]
  %v627 = vld [vmem:[#allocation2 + $0x130] sm:$0xff]
  %v628 = vld [vmem:[#allocation2 + $0x138] sm:$0xff]
  %v629 = vld [vmem:[#allocation2 + $0x140] sm:$0xff]
  %v630 = vld [vmem:[#allocation2 + $0x148] sm:$0xff]
  %v631 = vld [vmem:[#allocation2 + $0x150] sm:$0xff]
  %v632 = vld [vmem:[#allocation2 + $0x158] sm:$0xff]
  %v633 = vld [vmem:[#allocation2 + $0x160] sm:$0xff]
  %v634 = vld [vmem:[#allocation2 + $0x168] sm:$0xff]
  %v635 = vld [vmem:[#allocation2 + $0x170] sm:$0xff]
  %v636 = vld [vmem:[#allocation2 + $0x178] sm:$0xff]
  %v637 = vld [vmem:[#allocation2 + $0x180] sm:$0xff]
  %v638 = vld [vmem:[#allocation2 + $0x188] sm:$0xff]
  %v639 = vld [vmem:[#allocation2 + $0x190] sm:$0xff]
  %v640 = vld [vmem:[#allocation2 + $0x198] sm:$0xff]
  %v641 = vld [vmem:[#allocation2 + $0x1a0] sm:$0xff]
  %v642 = vld [vmem:[#allocation2 + $0x1a8] sm:$0xff]
  %v643 = vld [vmem:[%s2] sm:$0xff]
  %v644 = vld [vmem:[%s2 + $0x8] sm:$0xff]
  %v645 = vld [vmem:[%s2 + $0x10] sm:$0xff]
  %v646 = vld [vmem:[%s2 + $0x18] sm:$0xff]
  %648 = vset.pattern.permute.xlu0 0
  %649 = vperm.xlu0 %648, %v643
  %v650 = vpop.permute.xlu0 %649
  %653 = vset.pattern.permute.xlu0 0
  %654 = vperm.xlu0 %653, %v644
  %v655 = vpop.permute.xlu0 %654
  %658 = vset.pattern.permute.xlu0 0
  %659 = vperm.xlu0 %658, %v645
  %v660 = vpop.permute.xlu0 %659
  %663 = vset.pattern.permute.xlu0 0
  %664 = vperm.xlu0 %663, %v646
  %v665 = vpop.permute.xlu0 %664
  %v671 = vunpack.c.l.b16 %v585
  %v672 = vunpack.c.h.b16 %v585
  %v673 = vunpack.c.l.b16 %v586
  %v674 = vunpack.c.h.b16 %v586
  %v675 = vunpack.c.l.b16 %v587
  %v676 = vunpack.c.h.b16 %v587
  %v677 = vunpack.c.l.b16 %v588
  %v678 = vunpack.c.h.b16 %v588
  %v679 = vpack.c.b16 %v673, %v671
  %v680 = vpack.c.b16 %v674, %v672
  %v681 = vpack.c.b16 %v677, %v675
  %v682 = vpack.c.b16 %v678, %v676
  %v739 = vunpack.c.l.b16 %v589
  %v740 = vunpack.c.h.b16 %v589
  %v741 = vunpack.c.l.b16 %v590
  %v742 = vunpack.c.h.b16 %v590
  %v743 = vunpack.c.l.b16 %v591
  %v744 = vunpack.c.h.b16 %v591
  %v745 = vunpack.c.l.b16 %v592
  %v746 = vunpack.c.h.b16 %v592
  %v747 = vunpack.c.l.b16 %v593
  %v748 = vunpack.c.h.b16 %v593
  %v749 = vunpack.c.l.b16 %v594
  %v750 = vunpack.c.h.b16 %v594
  %v751 = vunpack.c.l.b16 %v595
  %v752 = vunpack.c.h.b16 %v595
  %v753 = vunpack.c.l.b16 %v596
  %v754 = vunpack.c.h.b16 %v596
  %v755 = vunpack.c.l.b16 %v597
  %v756 = vunpack.c.h.b16 %v597
  %v757 = vunpack.c.l.b16 %v598
  %v758 = vunpack.c.h.b16 %v598
  %v759 = vunpack.c.l.b16 %v599
  %v760 = vunpack.c.h.b16 %v599
  %v761 = vunpack.c.l.b16 %v600
  %v762 = vunpack.c.h.b16 %v600
  %v763 = vunpack.c.l.b16 %v601
  %v764 = vunpack.c.h.b16 %v601
  %v765 = vunpack.c.l.b16 %v602
  %v766 = vunpack.c.h.b16 %v602
  %v767 = vunpack.c.l.b16 %v603
  %v768 = vunpack.c.h.b16 %v603
  %v769 = vunpack.c.l.b16 %v604
  %v770 = vunpack.c.h.b16 %v604
  %v771 = vunpack.c.l.b16 %v605
  %v772 = vunpack.c.h.b16 %v605
  %v773 = vunpack.c.l.b16 %v606
  %v774 = vunpack.c.h.b16 %v606
  %v775 = vunpack.c.l.b16 %v607
  %v776 = vunpack.c.h.b16 %v607
  %v777 = vunpack.c.l.b16 %v608
  %v778 = vunpack.c.h.b16 %v608
  %v779 = vunpack.c.l.b16 %v609
  %v780 = vunpack.c.h.b16 %v609
  %v781 = vunpack.c.l.b16 %v610
  %v782 = vunpack.c.h.b16 %v610
  %v783 = vunpack.c.l.b16 %v611
  %v784 = vunpack.c.h.b16 %v611
  %v785 = vunpack.c.l.b16 %v612
  %v786 = vunpack.c.h.b16 %v612
  %v787 = vunpack.c.l.b16 %v613
  %v788 = vunpack.c.h.b16 %v613
  %v789 = vunpack.c.l.b16 %v614
  %v790 = vunpack.c.h.b16 %v614
  %v791 = vunpack.c.l.b16 %v615
  %v792 = vunpack.c.h.b16 %v615
  %v793 = vunpack.c.l.b16 %v616
  %v794 = vunpack.c.h.b16 %v616
  %v795 = vunpack.c.l.b16 %v617
  %v796 = vunpack.c.h.b16 %v617
  %v797 = vunpack.c.l.b16 %v618
  %v798 = vunpack.c.h.b16 %v618
  %v799 = vunpack.c.l.b16 %v619
  %v800 = vunpack.c.h.b16 %v619
  %v801 = vunpack.c.l.b16 %v620
  %v802 = vunpack.c.h.b16 %v620
  %v803 = vunpack.c.l.b16 %v621
  %v804 = vunpack.c.h.b16 %v621
  %v805 = vunpack.c.l.b16 %v622
  %v806 = vunpack.c.h.b16 %v622
  %v807 = vunpack.c.l.b16 %v623
  %v808 = vunpack.c.h.b16 %v623
  %v809 = vunpack.c.l.b16 %v624
  %v810 = vunpack.c.h.b16 %v624
  %v811 = vunpack.c.l.b16 %v625
  %v812 = vunpack.c.h.b16 %v625
  %v813 = vunpack.c.l.b16 %v626
  %v814 = vunpack.c.h.b16 %v626
  %v815 = vunpack.c.l.b16 %v627
  %v816 = vunpack.c.h.b16 %v627
  %v817 = vunpack.c.l.b16 %v628
  %v818 = vunpack.c.h.b16 %v628
  %v819 = vunpack.c.l.b16 %v629
  %v820 = vunpack.c.h.b16 %v629
  %v821 = vunpack.c.l.b16 %v630
  %v822 = vunpack.c.h.b16 %v630
  %v823 = vunpack.c.l.b16 %v631
  %v824 = vunpack.c.h.b16 %v631
  %v825 = vunpack.c.l.b16 %v632
  %v826 = vunpack.c.h.b16 %v632
  %v827 = vunpack.c.l.b16 %v633
  %v828 = vunpack.c.h.b16 %v633
  %v829 = vunpack.c.l.b16 %v634
  %v830 = vunpack.c.h.b16 %v634
  %v831 = vunpack.c.l.b16 %v635
  %v832 = vunpack.c.h.b16 %v635
  %v833 = vunpack.c.l.b16 %v636
  %v834 = vunpack.c.h.b16 %v636
  %v835 = vunpack.c.l.b16 %v637
  %v836 = vunpack.c.h.b16 %v637
  %v837 = vunpack.c.l.b16 %v638
  %v838 = vunpack.c.h.b16 %v638
  %v839 = vunpack.c.l.b16 %v639
  %v840 = vunpack.c.h.b16 %v639
  %v841 = vunpack.c.l.b16 %v640
  %v842 = vunpack.c.h.b16 %v640
  %v843 = vunpack.c.l.b16 %v641
  %v844 = vunpack.c.h.b16 %v641
  %v845 = vunpack.c.l.b16 %v642
  %v846 = vunpack.c.h.b16 %v642
  %v847 = vpack.c.b16 %v745, %v739
  %v848 = vpack.c.b16 %v746, %v740
  %v849 = vpack.c.b16 %v747, %v741
  %v850 = vpack.c.b16 %v748, %v742
  %v851 = vpack.c.b16 %v749, %v743
  %v852 = vpack.c.b16 %v750, %v744
  %v853 = vpack.c.b16 %v757, %v751
  %v854 = vpack.c.b16 %v758, %v752
  %v855 = vpack.c.b16 %v759, %v753
  %v856 = vpack.c.b16 %v760, %v754
  %v857 = vpack.c.b16 %v761, %v755
  %v858 = vpack.c.b16 %v762, %v756
  %v859 = vpack.c.b16 %v769, %v763
  %v860 = vpack.c.b16 %v770, %v764
  %v861 = vpack.c.b16 %v771, %v765
  %v862 = vpack.c.b16 %v772, %v766
  %v863 = vpack.c.b16 %v773, %v767
  %v864 = vpack.c.b16 %v774, %v768
  %v865 = vpack.c.b16 %v781, %v775
  %v866 = vpack.c.b16 %v782, %v776
  %v867 = vpack.c.b16 %v783, %v777
  %v868 = vpack.c.b16 %v784, %v778
  %v869 = vpack.c.b16 %v785, %v779
  %v870 = vpack.c.b16 %v786, %v780
  %v871 = vpack.c.b16 %v793, %v787
  %v872 = vpack.c.b16 %v794, %v788
  %v873 = vpack.c.b16 %v795, %v789
  %v874 = vpack.c.b16 %v796, %v790
  %v875 = vpack.c.b16 %v797, %v791
  %v876 = vpack.c.b16 %v798, %v792
  %v877 = vpack.c.b16 %v805, %v799
  %v878 = vpack.c.b16 %v806, %v800
  %v879 = vpack.c.b16 %v807, %v801
  %v880 = vpack.c.b16 %v808, %v802
  %v881 = vpack.c.b16 %v809, %v803
  %v882 = vpack.c.b16 %v810, %v804
  %v883 = vpack.c.b16 %v817, %v811
  %v884 = vpack.c.b16 %v818, %v812
  %v885 = vpack.c.b16 %v819, %v813
  %v886 = vpack.c.b16 %v820, %v814
  %v887 = vpack.c.b16 %v821, %v815
  %v888 = vpack.c.b16 %v822, %v816
  %v889 = vpack.c.b16 %v829, %v823
  %v890 = vpack.c.b16 %v830, %v824
  %v891 = vpack.c.b16 %v831, %v825
  %v892 = vpack.c.b16 %v832, %v826
  %v893 = vpack.c.b16 %v833, %v827
  %v894 = vpack.c.b16 %v834, %v828
  %v895 = vpack.c.b16 %v841, %v835
  %v896 = vpack.c.b16 %v842, %v836
  %v897 = vpack.c.b16 %v843, %v837
  %v898 = vpack.c.b16 %v844, %v838
  %v899 = vpack.c.b16 %v845, %v839
  %v900 = vpack.c.b16 %v846, %v840
  %vm955 = vcmask 130048
  %v957 = vsel %vm955, %v680, 0
  %v960 = vsel %vm955, %v682, 0
  %962 = vmatprep.subr.bf16.mxu0 %v890
  %963 = vmatpush1.bf16.msra.mxu0 %v889
  %964 = vmatprep.subr.bf16.mxu0 %v884
  %965 = vmatpush1.bf16.msra.mxu0 %v883
  %966 = vmatprep.subr.bf16.mxu0 %v878
  %967 = vmatpush1.bf16.msra.mxu0 %v877
  %968 = vmatprep.subr.bf16.mxu0 %v872
  %969 = vmatpush1.bf16.msra.mxu0 %v871
  %970 = vmatprep.subr.bf16.mxu0 %v866
  %971 = vmatpush1.bf16.msra.mxu0 %v865
  %972 = vmatprep.subr.bf16.mxu0 %v860
  %973 = vmatpush1.bf16.msra.mxu0 %v859
  %974 = vmatprep.subr.bf16.mxu0 %v854
  %975 = vmatpush1.bf16.msra.mxu0 %v853
  %976 = vmatprep.subr.bf16.mxu0 %v848
  %977 = vmatpush1.bf16.msra.mxu0 %v847
  %978 = vmatprep.subr.bf16.mxu0 0
  %979 = vmatpush2.bf16.msra.mxu0 0
  %980 = vmatprep.subr.bf16.mxu0 0
  %981 = vmatpush2.bf16.msra.mxu0 0
  %982 = vmatprep.subr.bf16.mxu0 0
  %983 = vmatpush2.bf16.msra.mxu0 0
  %984 = vmatprep.subr.bf16.mxu0 0
  %985 = vmatpush2.bf16.msra.mxu0 0
  %986 = vmatprep.subr.bf16.mxu0 0
  %987 = vmatpush2.bf16.msra.mxu0 0
  %988 = vmatprep.subr.bf16.mxu0 0
  %989 = vmatpush2.bf16.msra.mxu0 0
  %990 = vmatprep.subr.bf16.mxu0 0
  %991 = vmatpush2.bf16.msra.mxu0 0
  %992 = vmatprep.subr.bf16.mxu0 %v896
  %993 = vmatpush2.bf16.msra.mxu0 %v895
  %994 = vmatprep.mubr.bf16.mxu0 %v957
  %995 = vmatmul.mubr.bf16.gmra.mxu0 %v679
  %v996 = vpop.f32.mrf.mxu0
  %v997 = vadd.f32 %v650, %v996
  %v998 = vpop.f32.mrf.mxu0
  %v999 = vadd.f32 %v650, %v998
  %v1000 = vpop.f32.mrf.mxu0
  %v1001 = vadd.f32 %v655, %v1000
  %v1002 = vpop.f32.mrf.mxu0
  %v1003 = vadd.f32 %v655, %v1002
  %1004 = vmatprep.mubr.bf16.mxu0 %v960
  %1005 = vmatmul.mubr.bf16.gmra.mxu0 %v681
  %v1006 = vpop.f32.mrf.mxu0
  %v1007 = vadd.f32 %v660, %v1006
  %v1008 = vpop.f32.mrf.mxu0
  %v1009 = vadd.f32 %v660, %v1008
  %v1010 = vpop.f32.mrf.mxu0
  %v1011 = vadd.f32 %v665, %v1010
  %v1012 = vpop.f32.mrf.mxu0
  %v1013 = vadd.f32 %v665, %v1012
  %1014 = vdwg.mxu0
  %1015 = vmatprep.subr.bf16.mxu0 %v892
  %1016 = vmatpush1.bf16.msra.mxu0 %v891
  %1017 = vmatprep.subr.bf16.mxu0 %v886
  %1018 = vmatpush1.bf16.msra.mxu0 %v885
  %1019 = vmatprep.subr.bf16.mxu0 %v880
  %1020 = vmatpush1.bf16.msra.mxu0 %v879
  %1021 = vmatprep.subr.bf16.mxu0 %v874
  %1022 = vmatpush1.bf16.msra.mxu0 %v873
  %1023 = vmatprep.subr.bf16.mxu0 %v868
  %1024 = vmatpush1.bf16.msra.mxu0 %v867
  %1025 = vmatprep.subr.bf16.mxu0 %v862
  %1026 = vmatpush1.bf16.msra.mxu0 %v861
  %1027 = vmatprep.subr.bf16.mxu0 %v856
  %1028 = vmatpush1.bf16.msra.mxu0 %v855
  %1029 = vmatprep.subr.bf16.mxu0 %v850
  %1030 = vmatpush1.bf16.msra.mxu0 %v849
  %1031 = vmatprep.subr.bf16.mxu0 0
  %1032 = vmatpush2.bf16.msra.mxu0 0
  %1033 = vmatprep.subr.bf16.mxu0 0
  %1034 = vmatpush2.bf16.msra.mxu0 0
  %1035 = vmatprep.subr.bf16.mxu0 0
  %1036 = vmatpush2.bf16.msra.mxu0 0
  %1037 = vmatprep.subr.bf16.mxu0 0
  %1038 = vmatpush2.bf16.msra.mxu0 0
  %1039 = vmatprep.subr.bf16.mxu0 0
  %1040 = vmatpush2.bf16.msra.mxu0 0
  %1041 = vmatprep.subr.bf16.mxu0 0
  %1042 = vmatpush2.bf16.msra.mxu0 0
  %1043 = vmatprep.subr.bf16.mxu0 0
  %1044 = vmatpush2.bf16.msra.mxu0 0
  %1045 = vmatprep.subr.bf16.mxu0 %v898
  %1046 = vmatpush2.bf16.msra.mxu0 %v897
  %1047 = vmatprep.mubr.bf16.mxu0 %v957
  %1048 = vmatmul.mubr.bf16.gmra.mxu0 %v679
  %v1049 = vpop.f32.mrf.mxu0
  %v1050 = vadd.f32 %v650, %v1049
  %v1051 = vpop.f32.mrf.mxu0
  %v1052 = vadd.f32 %v650, %v1051
  %v1053 = vpop.f32.mrf.mxu0
  %v1054 = vadd.f32 %v655, %v1053
  %v1055 = vpop.f32.mrf.mxu0
  %v1056 = vadd.f32 %v655, %v1055
  %1057 = vmatprep.mubr.bf16.mxu0 %v960
  %1058 = vmatmul.mubr.bf16.gmra.mxu0 %v681
  %v1059 = vpop.f32.mrf.mxu0
  %v1060 = vadd.f32 %v660, %v1059
  %v1061 = vpop.f32.mrf.mxu0
  %v1062 = vadd.f32 %v660, %v1061
  %v1063 = vpop.f32.mrf.mxu0
  %v1064 = vadd.f32 %v665, %v1063
  %v1065 = vpop.f32.mrf.mxu0
  %v1066 = vadd.f32 %v665, %v1065
  %1067 = vdwg.mxu0
  %1068 = vmatprep.subr.bf16.mxu0 %v894
  %1069 = vmatpush1.bf16.msra.mxu0 %v893
  %1070 = vmatprep.subr.bf16.mxu0 %v888
  %1071 = vmatpush1.bf16.msra.mxu0 %v887
  %1072 = vmatprep.subr.bf16.mxu0 %v882
  %1073 = vmatpush1.bf16.msra.mxu0 %v881
  %1074 = vmatprep.subr.bf16.mxu0 %v876
  %1075 = vmatpush1.bf16.msra.mxu0 %v875
  %1076 = vmatprep.subr.bf16.mxu0 %v870
  %1077 = vmatpush1.bf16.msra.mxu0 %v869
  %1078 = vmatprep.subr.bf16.mxu0 %v864
  %1079 = vmatpush1.bf16.msra.mxu0 %v863
  %1080 = vmatprep.subr.bf16.mxu0 %v858
  %1081 = vmatpush1.bf16.msra.mxu0 %v857
  %1082 = vmatprep.subr.bf16.mxu0 %v852
  %1083 = vmatpush1.bf16.msra.mxu0 %v851
  %1084 = vmatprep.subr.bf16.mxu0 0
  %1085 = vmatpush2.bf16.msra.mxu0 0
  %1086 = vmatprep.subr.bf16.mxu0 0
  %1087 = vmatpush2.bf16.msra.mxu0 0
  %1088 = vmatprep.subr.bf16.mxu0 0
  %1089 = vmatpush2.bf16.msra.mxu0 0
  %1090 = vmatprep.subr.bf16.mxu0 0
  %1091 = vmatpush2.bf16.msra.mxu0 0
  %1092 = vmatprep.subr.bf16.mxu0 0
  %1093 = vmatpush2.bf16.msra.mxu0 0
  %1094 = vmatprep.subr.bf16.mxu0 0
  %1095 = vmatpush2.bf16.msra.mxu0 0
  %1096 = vmatprep.subr.bf16.mxu0 0
  %1097 = vmatpush2.bf16.msra.mxu0 0
  %1098 = vmatprep.subr.bf16.mxu0 %v900
  %1099 = vmatpush2.bf16.msra.mxu0 %v899
  %1100 = vmatprep.mubr.bf16.mxu0 %v957
  %1101 = vmatmul.mubr.bf16.gmra.mxu0 %v679
  %v1102 = vpop.f32.mrf.mxu0
  %v1103 = vadd.f32 %v650, %v1102
  %v1104 = vpop.f32.mrf.mxu0
  %v1105 = vadd.f32 %v650, %v1104
  %v1106 = vpop.f32.mrf.mxu0
  %v1107 = vadd.f32 %v655, %v1106
  %v1108 = vpop.f32.mrf.mxu0
  %v1109 = vadd.f32 %v655, %v1108
  %1110 = vmatprep.mubr.bf16.mxu0 %v960
  %1111 = vmatmul.mubr.bf16.gmra.mxu0 %v681
  %v1112 = vpop.f32.mrf.mxu0
  %v1113 = vadd.f32 %v660, %v1112
  %v1114 = vpop.f32.mrf.mxu0
  %v1115 = vadd.f32 %v660, %v1114
  %v1116 = vpop.f32.mrf.mxu0
  %v1117 = vadd.f32 %v665, %v1116
  %v1118 = vpop.f32.mrf.mxu0
  %v1119 = vadd.f32 %v665, %v1118
  %1120 = vdwg.mxu0
  %v1121 = vmax.f32 %v997, 0.0
  %v1122 = vmax.f32 %v999, 0.0
  %v1123 = vmax.f32 %v1050, 0.0
  %v1124 = vmax.f32 %v1052, 0.0
  %v1125 = vmax.f32 %v1103, 0.0
  %v1126 = vmax.f32 %v1105, 0.0
  %v1127 = vmax.f32 %v1001, 0.0
  %v1128 = vmax.f32 %v1003, 0.0
  %v1129 = vmax.f32 %v1054, 0.0
  %v1130 = vmax.f32 %v1056, 0.0
  %v1131 = vmax.f32 %v1107, 0.0
  %v1132 = vmax.f32 %v1109, 0.0
  %v1133 = vmax.f32 %v1007, 0.0
  %v1134 = vmax.f32 %v1009, 0.0
  %v1135 = vmax.f32 %v1060, 0.0
  %v1136 = vmax.f32 %v1062, 0.0
  %v1137 = vmax.f32 %v1113, 0.0
  %v1138 = vmax.f32 %v1115, 0.0
  %v1139 = vmax.f32 %v1011, 0.0
  %v1140 = vmax.f32 %v1013, 0.0
  %v1141 = vmax.f32 %v1064, 0.0
  %v1142 = vmax.f32 %v1066, 0.0
  %v1143 = vmax.f32 %v1117, 0.0
  %v1144 = vmax.f32 %v1119, 0.0
  %1145 = vst [vmem:[%s3] sm:$0xff] %v1121
  %1146 = vst [vmem:[%s3 + $0x8] sm:$0xff] %v1122
  %1147 = vst [vmem:[%s3 + $0x10] sm:$0xff] %v1123
  %1148 = vst [vmem:[%s3 + $0x18] sm:$0xff] %v1127
  %1149 = vst [vmem:[%s3 + $0x20] sm:$0xff] %v1128
  %1150 = vst [vmem:[%s3 + $0x28] sm:$0xff] %v1129
  %1151 = vst [vmem:[%s3 + $0x30] sm:$0xff] %v1133
  %1152 = vst [vmem:[%s3 + $0x38] sm:$0xff] %v1134
  %1153 = vst [vmem:[%s3 + $0x40] sm:$0xff] %v1135
  %1154 = vst [vmem:[%s3 + $0x48] sm:$0xff] %v1139
  %1155 = vst [vmem:[%s3 + $0x50] sm:$0xff] %v1140
  %1156 = vst [vmem:[%s3 + $0x58] sm:$0xff] %v1141
  %s1157 = scalar_lea.vmem %s3, 96
  %1158 = vst [vmem:[%s1157] sm:$0xff] %v1124
  %1159 = vst [vmem:[%s1157 + $0x8] sm:$0xff] %v1125
  %1160 = vst [vmem:[%s1157 + $0x10] sm:$0xff] %v1126
  %1161 = vst [vmem:[%s1157 + $0x18] sm:$0xff] %v1130
  %1162 = vst [vmem:[%s1157 + $0x20] sm:$0xff] %v1131
  %1163 = vst [vmem:[%s1157 + $0x28] sm:$0xff] %v1132
  %1164 = vst [vmem:[%s1157 + $0x30] sm:$0xff] %v1136
  %1165 = vst [vmem:[%s1157 + $0x38] sm:$0xff] %v1137
  %1166 = vst [vmem:[%s1157 + $0x40] sm:$0xff] %v1138
  %1167 = vst [vmem:[%s1157 + $0x48] sm:$0xff] %v1142
  %1168 = vst [vmem:[%s1157 + $0x50] sm:$0xff] %v1143
  %1169 = vst [vmem:[%s1157 + $0x58] sm:$0xff] %v1144
  // Predicated region
  $region14: #{res_gen_forward.1} parent=0 // pred_check
    _
  $region15: #{res_gen_forward.1} parent=0 // pred_check_branch
    %1171 = sbr.rel (0) target = $region17
  $region16: #{res_gen_forward.1} parent=0 // pred_region
    _
  $region17: #{res_gen_forward.1} parent=0 // pred_fallthru
    _
  // Predicated region
  $region18: #{res_gen_forward.1} parent=0 // pred_check
    _
  $region19: #{res_gen_forward.1} parent=0 // pred_check_branch
    %1173 = sbr.rel (0) target = $region21
  $region20: #{res_gen_forward.1} parent=0 // pred_region
    _
  $region21: #{res_gen_forward.1} parent=0 // pred_fallthru
    _

</llo_original>
